<compile_context>
chip_gen: v5e
topology: v5e:2x2
jax: 0.10.0
libtpu: 0.0.40
codegen_flags: <defaults>
</compile_context>

<pallas_src>
import jax
import jax.numpy as jnp
from jax.experimental import pallas as pl
from jax.experimental.pallas import tpu as pltpu

_LANE = 128
_SUBLANE = 8


def _round_up(x, m):
    return (x + m - 1) // m * m


def _pad2(a, rows, cols):
    r, c = a.shape
    return jnp.pad(a, ((0, rows - r), (0, cols - c)))


def _leaky_relu(x, negative_slope=0.01):
    # matches torch.nn.LeakyReLU() default negative_slope=0.01
    return jnp.where(x > 0, x, negative_slope * x)


def mnist_generator_kernel(z_ref,
                           w1_ref, b1_ref,
                           w2_ref, b2_ref,
                           w3_ref, b3_ref,
                           w4_ref, b4_ref,
                           out_ref):
    # One (TM, *) batch tile per grid step; weights/biases are VMEM-resident.
    h = jnp.dot(z_ref[...], w1_ref[...], preferred_element_type=jnp.float32) + b1_ref[...]
    h = _leaky_relu(h)
    h = jnp.dot(h, w2_ref[...], preferred_element_type=jnp.float32) + b2_ref[...]
    h = _leaky_relu(h)
    h = jnp.dot(h, w3_ref[...], preferred_element_type=jnp.float32) + b3_ref[...]
    h = _leaky_relu(h)
    h = jnp.dot(h, w4_ref[...], preferred_element_type=jnp.float32) + b4_ref[...]
    out_ref[...] = jnp.tanh(h).astype(out_ref.dtype)


@jax.jit
def mnist_generator_forward(z, params):
    """z: (batch, latent_dim) f32 -> (batch, prod(image_size)) f32."""
    (w1, b1), (w2, b2), (w3, b3), (w4, b4) = params
    batch, latent = z.shape
    out_dim = w4.shape[1]

    # Lane-dense padded feature widths (multiples of 128).
    lat_p = _round_up(latent, _LANE)
    d1_p = _round_up(w1.shape[1], _LANE)
    d2_p = _round_up(w2.shape[1], _LANE)
    d3_p = _round_up(w3.shape[1], _LANE)
    out_p = _round_up(out_dim, _LANE)            # 784 -> 896

    # Batch tile: big enough for MXU row utilization / few grid steps, but
    # never over-pad a tiny batch.
    tm = min(512, _round_up(batch, _SUBLANE))
    batch_p = _round_up(batch, tm)
    grid = (batch_p // tm,)

    # Zero padding is a no-op for matmul / bias / LeakyReLU; padded outputs
    # are sliced away below.
    z_p = _pad2(z, batch_p, lat_p)
    w1_p, b1_p = _pad2(w1, lat_p, d1_p), _pad2(b1, 1, d1_p)
    w2_p, b2_p = _pad2(w2, d1_p, d2_p), _pad2(b2, 1, d2_p)
    w3_p, b3_p = _pad2(w3, d2_p, d3_p), _pad2(b3, 1, d3_p)
    w4_p, b4_p = _pad2(w4, d3_p, out_p), _pad2(b4, 1, out_p)

    def resident(shape):
        # Constant index_map -> params DMA'd once, resident across batch tiles.
        return pl.BlockSpec(shape, lambda i: (0, 0))

    out_padded = pl.pallas_call(
        mnist_generator_kernel,
        out_shape=jax.ShapeDtypeStruct((batch_p, out_p), jnp.float32),
        grid_spec=pl.GridSpec(
            grid=grid,
            in_specs=[
                pl.BlockSpec((tm, lat_p), lambda i: (i, 0)),   # z batch tile
                resident((lat_p, d1_p)), resident((1, d1_p)),
                resident((d1_p, d2_p)), resident((1, d2_p)),
                resident((d2_p, d3_p)), resident((1, d3_p)),
                resident((d3_p, out_p)), resident((1, out_p)),
            ],
            out_specs=pl.BlockSpec((tm, out_p), lambda i: (i, 0)),
        ),
        compiler_params=pltpu.CompilerParams(
            dimension_semantics=("parallel",),    # megacore on v7x, no-op elsewhere
            vmem_limit_bytes=64 << 20,
        ),
    )(z_p, w1_p, b1_p, w2_p, b2_p, w3_p, b3_p, w4_p, b4_p)

    return out_padded[:batch, :out_dim]


def init_params(key, latent_dim, h_dim, out_dim):
    """Deterministic synthetic init; weights stored transposed as (in, out)."""
    dims = [(latent_dim, h_dim),
            (h_dim, h_dim * 2),
            (h_dim * 2, h_dim * 4),
            (h_dim * 4, out_dim)]
    params = []
    for (fan_in, fan_out) in dims:
        key, kw, kb = jax.random.split(key, 3)
        bound = 1.0 / jnp.sqrt(jnp.float32(fan_in))
        w = jax.random.uniform(kw, (fan_in, fan_out), jnp.float32, -bound, bound)
        b = jax.random.uniform(kb, (1, fan_out), jnp.float32, -bound, bound)
        params.append((w, b))
    return params


def reference_forward(z, params):
    h = z
    for i, (w, b) in enumerate(params):
        h = h @ w + b
        if i < 3:
            h = jnp.where(h > 0, h, 0.01 * h)
        else:
            h = jnp.tanh(h)
    return h


if __name__ == "__main__":
    # Small shapes consistent with the module: image_size=(1, 28, 28) -> 784 outputs.
    batch = 8
    latent_dim = 16
    h_dim = 32
    out_dim = 1 * 28 * 28  # np.prod(image_size)

    key = jax.random.PRNGKey(0)
    key, zkey = jax.random.split(key)
    z = jax.random.normal(zkey, (batch, latent_dim), jnp.float32)
    params = init_params(key, latent_dim, h_dim, out_dim)

    out = mnist_generator_forward(z, params)
    out = jax.block_until_ready(out)

    ref = reference_forward(z, params)
    assert out.shape == (batch, out_dim)
    assert jnp.allclose(out, ref, atol=1e-5, rtol=1e-5)
    print("KERNEL_OK")
</pallas_src>

<mosaic_0001>
module attributes {stable_mosaic.version = 11 : i64} {
  func.func @mnist_generator_kernel(%arg0: i32, %arg1: memref<8x128xf32, #tpu.memory_space<vmem>>, %arg2: memref<128x128xf32, #tpu.memory_space<vmem>>, %arg3: memref<1x128xf32, #tpu.memory_space<vmem>>, %arg4: memref<128x128xf32, #tpu.memory_space<vmem>>, %arg5: memref<1x128xf32, #tpu.memory_space<vmem>>, %arg6: memref<128x128xf32, #tpu.memory_space<vmem>>, %arg7: memref<1x128xf32, #tpu.memory_space<vmem>>, %arg8: memref<128x896xf32, #tpu.memory_space<vmem>>, %arg9: memref<1x896xf32, #tpu.memory_space<vmem>>, %arg10: memref<8x896xf32, #tpu.memory_space<vmem>>) attributes {dimension_semantics = [#tpu.dimension_semantics<parallel>], iteration_bounds = array<i64: 1>, scalar_prefetch = 0 : i64, scratch_operands = 0 : i64, tpu.core_type = #tpu.core_type<tc>, window_params = [{transform_indices = @transform_0, window_bounds = array<i64: 8, 128>}, {pipeline_mode = #tpu.pipeline_mode<synchronous>, transform_indices = @transform_1, window_bounds = array<i64: 128, 128>}, {pipeline_mode = #tpu.pipeline_mode<synchronous>, transform_indices = @transform_2, window_bounds = array<i64: 1, 128>}, {pipeline_mode = #tpu.pipeline_mode<synchronous>, transform_indices = @transform_3, window_bounds = array<i64: 128, 128>}, {pipeline_mode = #tpu.pipeline_mode<synchronous>, transform_indices = @transform_4, window_bounds = array<i64: 1, 128>}, {pipeline_mode = #tpu.pipeline_mode<synchronous>, transform_indices = @transform_5, window_bounds = array<i64: 128, 128>}, {pipeline_mode = #tpu.pipeline_mode<synchronous>, transform_indices = @transform_6, window_bounds = array<i64: 1, 128>}, {pipeline_mode = #tpu.pipeline_mode<synchronous>, transform_indices = @transform_7, window_bounds = array<i64: 128, 896>}, {pipeline_mode = #tpu.pipeline_mode<synchronous>, transform_indices = @transform_8, window_bounds = array<i64: 1, 896>}, {transform_indices = @transform_9, window_bounds = array<i64: 8, 896>}]} {
    %c0 = arith.constant 0 : index
    %c0_0 = arith.constant 0 : index
    %0 = vector.load %arg1[%c0, %c0_0] : memref<8x128xf32, #tpu.memory_space<vmem>>, vector<8x128xf32>
    %c0_1 = arith.constant 0 : index
    %c0_2 = arith.constant 0 : index
    %1 = vector.load %arg2[%c0_1, %c0_2] : memref<128x128xf32, #tpu.memory_space<vmem>>, vector<128x128xf32>
    %cst = arith.constant dense<0.000000e+00> : vector<8x128xf32>
    %2 = tpu.matmul %0, %1, %cst {dimension_numbers = #tpu.dot_dimension_numbers<[1], [0], [0], [1], [0, 0, 1, 1], [], []>} : vector<8x128xf32>, vector<128x128xf32>, vector<8x128xf32> -> vector<8x128xf32>
    %c0_3 = arith.constant 0 : index
    %c0_4 = arith.constant 0 : index
    %3 = vector.load %arg3[%c0_3, %c0_4] : memref<1x128xf32, #tpu.memory_space<vmem>>, vector<1x128xf32>
    %4 = vector.broadcast %3 : vector<1x128xf32> to vector<8x128xf32>
    %5 = arith.addf %2, %4 : vector<8x128xf32>
    %cst_5 = arith.constant 0.000000e+00 : f32
    %6 = vector.broadcast %cst_5 : f32 to vector<8x128xf32>
    %7 = arith.cmpf ogt, %5, %6 : vector<8x128xf32>
    %cst_6 = arith.constant 0.00999999977 : f32
    %8 = vector.broadcast %cst_6 : f32 to vector<8x128xf32>
    %9 = arith.mulf %8, %5 : vector<8x128xf32>
    %10 = arith.select %7, %5, %9 : vector<8x128xi1>, vector<8x128xf32>
    %c0_7 = arith.constant 0 : index
    %c0_8 = arith.constant 0 : index
    %11 = vector.load %arg4[%c0_7, %c0_8] : memref<128x128xf32, #tpu.memory_space<vmem>>, vector<128x128xf32>
    %cst_9 = arith.constant dense<0.000000e+00> : vector<8x128xf32>
    %12 = tpu.matmul %10, %11, %cst_9 {dimension_numbers = #tpu.dot_dimension_numbers<[1], [0], [0], [1], [0, 0, 1, 1], [], []>} : vector<8x128xf32>, vector<128x128xf32>, vector<8x128xf32> -> vector<8x128xf32>
    %c0_10 = arith.constant 0 : index
    %c0_11 = arith.constant 0 : index
    %13 = vector.load %arg5[%c0_10, %c0_11] : memref<1x128xf32, #tpu.memory_space<vmem>>, vector<1x128xf32>
    %14 = vector.broadcast %13 : vector<1x128xf32> to vector<8x128xf32>
    %15 = arith.addf %12, %14 : vector<8x128xf32>
    %cst_12 = arith.constant 0.000000e+00 : f32
    %16 = vector.broadcast %cst_12 : f32 to vector<8x128xf32>
    %17 = arith.cmpf ogt, %15, %16 : vector<8x128xf32>
    %cst_13 = arith.constant 0.00999999977 : f32
    %18 = vector.broadcast %cst_13 : f32 to vector<8x128xf32>
    %19 = arith.mulf %18, %15 : vector<8x128xf32>
    %20 = arith.select %17, %15, %19 : vector<8x128xi1>, vector<8x128xf32>
    %c0_14 = arith.constant 0 : index
    %c0_15 = arith.constant 0 : index
    %21 = vector.load %arg6[%c0_14, %c0_15] : memref<128x128xf32, #tpu.memory_space<vmem>>, vector<128x128xf32>
    %cst_16 = arith.constant dense<0.000000e+00> : vector<8x128xf32>
    %22 = tpu.matmul %20, %21, %cst_16 {dimension_numbers = #tpu.dot_dimension_numbers<[1], [0], [0], [1], [0, 0, 1, 1], [], []>} : vector<8x128xf32>, vector<128x128xf32>, vector<8x128xf32> -> vector<8x128xf32>
    %c0_17 = arith.constant 0 : index
    %c0_18 = arith.constant 0 : index
    %23 = vector.load %arg7[%c0_17, %c0_18] : memref<1x128xf32, #tpu.memory_space<vmem>>, vector<1x128xf32>
    %24 = vector.broadcast %23 : vector<1x128xf32> to vector<8x128xf32>
    %25 = arith.addf %22, %24 : vector<8x128xf32>
    %cst_19 = arith.constant 0.000000e+00 : f32
    %26 = vector.broadcast %cst_19 : f32 to vector<8x128xf32>
    %27 = arith.cmpf ogt, %25, %26 : vector<8x128xf32>
    %cst_20 = arith.constant 0.00999999977 : f32
    %28 = vector.broadcast %cst_20 : f32 to vector<8x128xf32>
    %29 = arith.mulf %28, %25 : vector<8x128xf32>
    %30 = arith.select %27, %25, %29 : vector<8x128xi1>, vector<8x128xf32>
    %c0_21 = arith.constant 0 : index
    %c0_22 = arith.constant 0 : index
    %31 = vector.load %arg8[%c0_21, %c0_22] : memref<128x896xf32, #tpu.memory_space<vmem>>, vector<128x896xf32>
    %cst_23 = arith.constant dense<0.000000e+00> : vector<8x896xf32>
    %32 = tpu.matmul %30, %31, %cst_23 {dimension_numbers = #tpu.dot_dimension_numbers<[1], [0], [0], [1], [0, 0, 1, 1], [], []>} : vector<8x128xf32>, vector<128x896xf32>, vector<8x896xf32> -> vector<8x896xf32>
    %c0_24 = arith.constant 0 : index
    %c0_25 = arith.constant 0 : index
    %33 = vector.load %arg9[%c0_24, %c0_25] : memref<1x896xf32, #tpu.memory_space<vmem>>, vector<1x896xf32>
    %34 = vector.broadcast %33 : vector<1x896xf32> to vector<8x896xf32>
    %35 = arith.addf %32, %34 : vector<8x896xf32>
    %36 = math.tanh %35 : vector<8x896xf32>
    %c0_26 = arith.constant 0 : index
    %c0_27 = arith.constant 0 : index
    %37 = vector.load %arg10[%c0_26, %c0_27] : memref<8x896xf32, #tpu.memory_space<vmem>>, vector<8x896xf32>
    tpu.vector_store %arg10[%c0_26, %c0_27], %36 {strides = array<i32>} : memref<8x896xf32, #tpu.memory_space<vmem>>, vector<8x896xf32>,
    return
  }
  func.func @transform_0(%arg0: i32) -> (i32, i32) {
    %c0_i32 = arith.constant 0 : i32
    %c0_i32_0 = arith.constant 0 : i32
    return %arg0, %c0_i32 : i32, i32
  }
  func.func @transform_1(%arg0: i32) -> (i32, i32) {
    %c0_i32 = arith.constant 0 : i32
    %c0_i32_0 = arith.constant 0 : i32
    %c0_i32_1 = arith.constant 0 : i32
    return %c0_i32, %c0_i32_0 : i32, i32
  }
  func.func @transform_2(%arg0: i32) -> (i32, i32) {
    %c0_i32 = arith.constant 0 : i32
    %c0_i32_0 = arith.constant 0 : i32
    %c0_i32_1 = arith.constant 0 : i32
    return %c0_i32, %c0_i32_0 : i32, i32
  }
  func.func @transform_3(%arg0: i32) -> (i32, i32) {
    %c0_i32 = arith.constant 0 : i32
    %c0_i32_0 = arith.constant 0 : i32
    %c0_i32_1 = arith.constant 0 : i32
    return %c0_i32, %c0_i32_0 : i32, i32
  }
  func.func @transform_4(%arg0: i32) -> (i32, i32) {
    %c0_i32 = arith.constant 0 : i32
    %c0_i32_0 = arith.constant 0 : i32
    %c0_i32_1 = arith.constant 0 : i32
    return %c0_i32, %c0_i32_0 : i32, i32
  }
  func.func @transform_5(%arg0: i32) -> (i32, i32) {
    %c0_i32 = arith.constant 0 : i32
    %c0_i32_0 = arith.constant 0 : i32
    %c0_i32_1 = arith.constant 0 : i32
    return %c0_i32, %c0_i32_0 : i32, i32
  }
  func.func @transform_6(%arg0: i32) -> (i32, i32) {
    %c0_i32 = arith.constant 0 : i32
    %c0_i32_0 = arith.constant 0 : i32
    %c0_i32_1 = arith.constant 0 : i32
    return %c0_i32, %c0_i32_0 : i32, i32
  }
  func.func @transform_7(%arg0: i32) -> (i32, i32) {
    %c0_i32 = arith.constant 0 : i32
    %c0_i32_0 = arith.constant 0 : i32
    %c0_i32_1 = arith.constant 0 : i32
    return %c0_i32, %c0_i32_0 : i32, i32
  }
  func.func @transform_8(%arg0: i32) -> (i32, i32) {
    %c0_i32 = arith.constant 0 : i32
    %c0_i32_0 = arith.constant 0 : i32
    %c0_i32_1 = arith.constant 0 : i32
    return %c0_i32, %c0_i32_0 : i32, i32
  }
  func.func @transform_9(%arg0: i32) -> (i32, i32) {
    %c0_i32 = arith.constant 0 : i32
    %c0_i32_0 = arith.constant 0 : i32
    return %arg0, %c0_i32 : i32, i32
  }
}

</mosaic_0001>

<llo_original>
// kernel: mnist_generator_forward.1
$region0: #{mnist_generator_forward.1}
  #allocation0 [shape = 'u32[]', space=smem, size = 0x4, offset = 0x4, fixed_abs, tag = 'smem constant byte address 0x4 - core index']
  #allocation1 [shape = 'u32[72,128]{1,0:T(1,128)}', space=vmem, size = 0x9000, scoped, tag = 'internal scratch']
  %s0 = inlined_call_operand.vmem [shape: f32[8,128], index: 0, kind: input, shape index: {}]
  %s1 = inlined_call_operand.vmem [shape: f32[128,128], index: 1, kind: input, shape index: {}]
  %s2 = inlined_call_operand.vmem [shape: f32[1,128], index: 2, kind: input, shape index: {}]
  %s3 = inlined_call_operand.vmem [shape: f32[128,128], index: 3, kind: input, shape index: {}]
  %s4 = inlined_call_operand.vmem [shape: f32[1,128], index: 4, kind: input, shape index: {}]
  %s5 = inlined_call_operand.vmem [shape: f32[128,128], index: 5, kind: input, shape index: {}]
  %s6 = inlined_call_operand.vmem [shape: f32[1,128], index: 6, kind: input, shape index: {}]
  %s7 = inlined_call_operand.vmem [shape: f32[128,896], index: 7, kind: input, shape index: {}]
  %s8 = inlined_call_operand.vmem [shape: f32[1,896], index: 8, kind: input, shape index: {}]
  %s9 = inlined_call_operand.hbm [shape: f32[8,896], index: 9, kind: output, shape index: {}]
  %s10 = sld [smem:[#allocation0]]
  $region46: #{mnist_generator_forward.1} parent=0
    _
  %s12 = ssub.s32 1, %s10
  %s13 = scalar_select 0, %s12, %s10
  $region1: #{mnist_generator_forward.1} parent=0
    #allocation2 [shape = 'u8[28672]{0}', space=vmem, size = 0x7000, scoped, tag = 'output window, operand 0, single buffered']
    #allocation3 [shape = 's32[1]{0}', space=sflag, size = 0x4, scoped, tag = 'scoped memory for mnist_generator_forward.1']
    %14 = vsyncpa [#allocation3], 0
    // Predicated region
    $region2: #{mnist_generator_forward.1} parent=1 // pred_check
      _
    $region3: #{mnist_generator_forward.1} parent=1 // pred_check_branch
      %16 = sbr.rel (0) target = $region5
    $region4: #{mnist_generator_forward.1} parent=1 // pred_region
      _
    $region5: #{mnist_generator_forward.1} parent=1 // pred_fallthru
      _
    // Predicated region
    $region6: #{mnist_generator_forward.1} parent=1 // pred_check
      _
    $region7: #{mnist_generator_forward.1} parent=1 // pred_check_branch
      %18 = sbr.rel (0) target = $region9
    $region8: #{mnist_generator_forward.1} parent=1 // pred_region
      _
    $region9: #{mnist_generator_forward.1} parent=1 // pred_fallthru
      _
    // Predicated region
    $region10: #{mnist_generator_forward.1} parent=1 // pred_check
      _
    $region11: #{mnist_generator_forward.1} parent=1 // pred_check_branch
      %20 = sbr.rel (0) target = $region13
    $region12: #{mnist_generator_forward.1} parent=1 // pred_region
      _
    $region13: #{mnist_generator_forward.1} parent=1 // pred_fallthru
      _
    // Predicated region
    $region14: #{mnist_generator_forward.1} parent=1 // pred_check
      _
    $region15: #{mnist_generator_forward.1} parent=1 // pred_check_branch
      %22 = sbr.rel (0) target = $region17
    $region16: #{mnist_generator_forward.1} parent=1 // pred_region
      _
    $region17: #{mnist_generator_forward.1} parent=1 // pred_fallthru
      _
    // Predicated region
    $region18: #{mnist_generator_forward.1} parent=1 // pred_check
      _
    $region19: #{mnist_generator_forward.1} parent=1 // pred_check_branch
      %24 = sbr.rel (0) target = $region21
    $region20: #{mnist_generator_forward.1} parent=1 // pred_region
      _
    $region21: #{mnist_generator_forward.1} parent=1 // pred_fallthru
      _
    // Predicated region
    $region22: #{mnist_generator_forward.1} parent=1 // pred_check
      _
    $region23: #{mnist_generator_forward.1} parent=1 // pred_check_branch
      %26 = sbr.rel (0) target = $region25
    $region24: #{mnist_generator_forward.1} parent=1 // pred_region
      _
    $region25: #{mnist_generator_forward.1} parent=1 // pred_fallthru
      _
    // Predicated region
    $region26: #{mnist_generator_forward.1} parent=1 // pred_check
      _
    $region27: #{mnist_generator_forward.1} parent=1 // pred_check_branch
      %28 = sbr.rel (0) target = $region29
    $region28: #{mnist_generator_forward.1} parent=1 // pred_region
      _
    $region29: #{mnist_generator_forward.1} parent=1 // pred_fallthru
      _
    // Predicated region
    $region30: #{mnist_generator_forward.1} parent=1 // pred_check
      _
    $region31: #{mnist_generator_forward.1} parent=1 // pred_check_branch
      %30 = sbr.rel (0) target = $region33
    $region32: #{mnist_generator_forward.1} parent=1 // pred_region
      _
    $region33: #{mnist_generator_forward.1} parent=1 // pred_fallthru
      _
    // Predicated region
    $region34: #{mnist_generator_forward.1} parent=1 // pred_check
      _
    $region35: #{mnist_generator_forward.1} parent=1 // pred_check_branch
      %32 = sbr.rel (0) target = $region37
    $region36: #{mnist_generator_forward.1} parent=1 // pred_region
      _
    $region37: #{mnist_generator_forward.1} parent=1 // pred_fallthru
      _
    %v33 = vld [vmem:[%s0] sm:$0xff]
    %v34 = vld [vmem:[%s1] sm:$0xff]
    %v35 = vld [vmem:[%s1 + $0x8] sm:$0xff]
    %v36 = vld [vmem:[%s1 + $0x10] sm:$0xff]
    %v37 = vld [vmem:[%s1 + $0x18] sm:$0xff]
    %v38 = vld [vmem:[%s1 + $0x20] sm:$0xff]
    %v39 = vld [vmem:[%s1 + $0x28] sm:$0xff]
    %v40 = vld [vmem:[%s1 + $0x30] sm:$0xff]
    %v41 = vld [vmem:[%s1 + $0x38] sm:$0xff]
    %v42 = vld [vmem:[%s1 + $0x40] sm:$0xff]
    %v43 = vld [vmem:[%s1 + $0x48] sm:$0xff]
    %v44 = vld [vmem:[%s1 + $0x50] sm:$0xff]
    %v45 = vld [vmem:[%s1 + $0x58] sm:$0xff]
    %v46 = vld [vmem:[%s1 + $0x60] sm:$0xff]
    %v47 = vld [vmem:[%s1 + $0x68] sm:$0xff]
    %v48 = vld [vmem:[%s1 + $0x70] sm:$0xff]
    %v49 = vld [vmem:[%s1 + $0x78] sm:$0xff]
    %v50 = vld [vmem:[%s2] sm:$0x1]
    %v52 = vperm.slane %v50, 0
    %54 = vmatpush.msra.mxu0 %v49
    %55 = vmatpush.msra.mxu0 %v48
    %56 = vmatpush.msra.mxu0 %v47
    %57 = vmatpush.msra.mxu0 %v46
    %58 = vmatpush.msra.mxu0 %v45
    %59 = vmatpush.msra.mxu0 %v44
    %60 = vmatpush.msra.mxu0 %v43
    %61 = vmatpush.msra.mxu0 %v42
    %62 = vmatpush.msra.mxu0 %v41
    %63 = vmatpush.msra.mxu0 %v40
    %64 = vmatpush.msra.mxu0 %v39
    %65 = vmatpush.msra.mxu0 %v38
    %66 = vmatpush.msra.mxu0 %v37
    %67 = vmatpush.msra.mxu0 %v36
    %68 = vmatpush.msra.mxu0 %v35
    %69 = vmatpush.msra.mxu0 %v34
    %70 = vmatmul.f32.gmra.mxu0 %v33
    %v71 = vpop.f32.mrf.mxu0
    %v72 = vadd.f32 %v52, %v71
    %73 = vdwg.mxu0
    %vm74 = vcmp.gt.f32.partialorder %v72, 0.0
    %v75 = vmul.f32 %v72, 0.01
    %v76 = vsel %vm74, %v72, %v75
    %v77 = vld [vmem:[%s3] sm:$0xff]
    %v78 = vld [vmem:[%s3 + $0x8] sm:$0xff]
    %v79 = vld [vmem:[%s3 + $0x10] sm:$0xff]
    %v80 = vld [vmem:[%s3 + $0x18] sm:$0xff]
    %v81 = vld [vmem:[%s3 + $0x20] sm:$0xff]
    %v82 = vld [vmem:[%s3 + $0x28] sm:$0xff]
    %v83 = vld [vmem:[%s3 + $0x30] sm:$0xff]
    %v84 = vld [vmem:[%s3 + $0x38] sm:$0xff]
    %v85 = vld [vmem:[%s3 + $0x40] sm:$0xff]
    %v86 = vld [vmem:[%s3 + $0x48] sm:$0xff]
    %v87 = vld [vmem:[%s3 + $0x50] sm:$0xff]
    %v88 = vld [vmem:[%s3 + $0x58] sm:$0xff]
    %v89 = vld [vmem:[%s3 + $0x60] sm:$0xff]
    %v90 = vld [vmem:[%s3 + $0x68] sm:$0xff]
    %v91 = vld [vmem:[%s3 + $0x70] sm:$0xff]
    %v92 = vld [vmem:[%s3 + $0x78] sm:$0xff]
    %v93 = vld [vmem:[%s4] sm:$0x1]
    %v95 = vperm.slane %v93, 0
    %97 = vmatpush.msra.mxu0 %v92
    %98 = vmatpush.msra.mxu0 %v91
    %99 = vmatpush.msra.mxu0 %v90
    %100 = vmatpush.msra.mxu0 %v89
    %101 = vmatpush.msra.mxu0 %v88
    %102 = vmatpush.msra.mxu0 %v87
    %103 = vmatpush.msra.mxu0 %v86
    %104 = vmatpush.msra.mxu0 %v85
    %105 = vmatpush.msra.mxu0 %v84
    %106 = vmatpush.msra.mxu0 %v83
    %107 = vmatpush.msra.mxu0 %v82
    %108 = vmatpush.msra.mxu0 %v81
    %109 = vmatpush.msra.mxu0 %v80
    %110 = vmatpush.msra.mxu0 %v79
    %111 = vmatpush.msra.mxu0 %v78
    %112 = vmatpush.msra.mxu0 %v77
    %113 = vmatmul.f32.gmra.mxu0 %v76
    %v114 = vpop.f32.mrf.mxu0
    %v115 = vadd.f32 %v95, %v114
    %116 = vdwg.mxu0
    %vm117 = vcmp.gt.f32.partialorder %v115, 0.0
    %v118 = vmul.f32 %v115, 0.01
    %v119 = vsel %vm117, %v115, %v118
    %v120 = vld [vmem:[%s5] sm:$0xff]
    %v121 = vld [vmem:[%s5 + $0x8] sm:$0xff]
    %v122 = vld [vmem:[%s5 + $0x10] sm:$0xff]
    %v123 = vld [vmem:[%s5 + $0x18] sm:$0xff]
    %v124 = vld [vmem:[%s5 + $0x20] sm:$0xff]
    %v125 = vld [vmem:[%s5 + $0x28] sm:$0xff]
    %v126 = vld [vmem:[%s5 + $0x30] sm:$0xff]
    %v127 = vld [vmem:[%s5 + $0x38] sm:$0xff]
    %v128 = vld [vmem:[%s5 + $0x40] sm:$0xff]
    %v129 = vld [vmem:[%s5 + $0x48] sm:$0xff]
    %v130 = vld [vmem:[%s5 + $0x50] sm:$0xff]
    %v131 = vld [vmem:[%s5 + $0x58] sm:$0xff]
    %v132 = vld [vmem:[%s5 + $0x60] sm:$0xff]
    %v133 = vld [vmem:[%s5 + $0x68] sm:$0xff]
    %v134 = vld [vmem:[%s5 + $0x70] sm:$0xff]
    %v135 = vld [vmem:[%s5 + $0x78] sm:$0xff]
    %v136 = vld [vmem:[%s6] sm:$0x1]
    %v138 = vperm.slane %v136, 0
    %140 = vmatpush.msra.mxu0 %v135
    %141 = vmatpush.msra.mxu0 %v134
    %142 = vmatpush.msra.mxu0 %v133
    %143 = vmatpush.msra.mxu0 %v132
    %144 = vmatpush.msra.mxu0 %v131
    %145 = vmatpush.msra.mxu0 %v130
    %146 = vmatpush.msra.mxu0 %v129
    %147 = vmatpush.msra.mxu0 %v128
    %148 = vmatpush.msra.mxu0 %v127
    %149 = vmatpush.msra.mxu0 %v126
    %150 = vmatpush.msra.mxu0 %v125
    %151 = vmatpush.msra.mxu0 %v124
    %152 = vmatpush.msra.mxu0 %v123
    %153 = vmatpush.msra.mxu0 %v122
    %154 = vmatpush.msra.mxu0 %v121
    %155 = vmatpush.msra.mxu0 %v120
    %156 = vmatmul.f32.gmra.mxu0 %v119
    %v157 = vpop.f32.mrf.mxu0
    %v158 = vadd.f32 %v138, %v157
    %159 = vdwg.mxu0
    %vm160 = vcmp.gt.f32.partialorder %v158, 0.0
    %v161 = vmul.f32 %v158, 0.01
    %v162 = vsel %vm160, %v158, %v161
    %v163 = vld [vmem:[%s7] sm:$0xff]
    %v164 = vld [vmem:[%s7 + $0x8] sm:$0xff]
    %v165 = vld [vmem:[%s7 + $0x10] sm:$0xff]
    %v166 = vld [vmem:[%s7 + $0x18] sm:$0xff]
    %v167 = vld [vmem:[%s7 + $0x20] sm:$0xff]
    %v168 = vld [vmem:[%s7 + $0x28] sm:$0xff]
    %v169 = vld [vmem:[%s7 + $0x30] sm:$0xff]
    %v170 = vld [vmem:[%s7 + $0x38] sm:$0xff]
    %v171 = vld [vmem:[%s7 + $0x40] sm:$0xff]
    %v172 = vld [vmem:[%s7 + $0x48] sm:$0xff]
    %v173 = vld [vmem:[%s7 + $0x50] sm:$0xff]
    %v174 = vld [vmem:[%s7 + $0x58] sm:$0xff]
    %v175 = vld [vmem:[%s7 + $0x60] sm:$0xff]
    %v176 = vld [vmem:[%s7 + $0x68] sm:$0xff]
    %v177 = vld [vmem:[%s7 + $0x70] sm:$0xff]
    %v178 = vld [vmem:[%s7 + $0x78] sm:$0xff]
    %v179 = vld [vmem:[%s7 + $0x80] sm:$0xff]
    %v180 = vld [vmem:[%s7 + $0x88] sm:$0xff]
    %v181 = vld [vmem:[%s7 + $0x90] sm:$0xff]
    %v182 = vld [vmem:[%s7 + $0x98] sm:$0xff]
    %v183 = vld [vmem:[%s7 + $0xa0] sm:$0xff]
    %v184 = vld [vmem:[%s7 + $0xa8] sm:$0xff]
    %v185 = vld [vmem:[%s7 + $0xb0] sm:$0xff]
    %v186 = vld [vmem:[%s7 + $0xb8] sm:$0xff]
    %v187 = vld [vmem:[%s7 + $0xc0] sm:$0xff]
    %v188 = vld [vmem:[%s7 + $0xc8] sm:$0xff]
    %v189 = vld [vmem:[%s7 + $0xd0] sm:$0xff]
    %v190 = vld [vmem:[%s7 + $0xd8] sm:$0xff]
    %v191 = vld [vmem:[%s7 + $0xe0] sm:$0xff]
    %v192 = vld [vmem:[%s7 + $0xe8] sm:$0xff]
    %v193 = vld [vmem:[%s7 + $0xf0] sm:$0xff]
    %v194 = vld [vmem:[%s7 + $0xf8] sm:$0xff]
    %v195 = vld [vmem:[%s7 + $0x100] sm:$0xff]
    %v196 = vld [vmem:[%s7 + $0x108] sm:$0xff]
    %v197 = vld [vmem:[%s7 + $0x110] sm:$0xff]
    %v198 = vld [vmem:[%s7 + $0x118] sm:$0xff]
    %v199 = vld [vmem:[%s7 + $0x120] sm:$0xff]
    %v200 = vld [vmem:[%s7 + $0x128] sm:$0xff]
    %v201 = vld [vmem:[%s7 + $0x130] sm:$0xff]
    %v202 = vld [vmem:[%s7 + $0x138] sm:$0xff]
    %v203 = vld [vmem:[%s7 + $0x140] sm:$0xff]
    %v204 = vld [vmem:[%s7 + $0x148] sm:$0xff]
    %v205 = vld [vmem:[%s7 + $0x150] sm:$0xff]
    %v206 = vld [vmem:[%s7 + $0x158] sm:$0xff]
    %v207 = vld [vmem:[%s7 + $0x160] sm:$0xff]
    %v208 = vld [vmem:[%s7 + $0x168] sm:$0xff]
    %v209 = vld [vmem:[%s7 + $0x170] sm:$0xff]
    %v210 = vld [vmem:[%s7 + $0x178] sm:$0xff]
    %v211 = vld [vmem:[%s7 + $0x180] sm:$0xff]
    %v212 = vld [vmem:[%s7 + $0x188] sm:$0xff]
    %v213 = vld [vmem:[%s7 + $0x190] sm:$0xff]
    %v214 = vld [vmem:[%s7 + $0x198] sm:$0xff]
    %v215 = vld [vmem:[%s7 + $0x1a0] sm:$0xff]
    %v216 = vld [vmem:[%s7 + $0x1a8] sm:$0xff]
    %v217 = vld [vmem:[%s7 + $0x1b0] sm:$0xff]
    %v218 = vld [vmem:[%s7 + $0x1b8] sm:$0xff]
    %v219 = vld [vmem:[%s7 + $0x1c0] sm:$0xff]
    %v220 = vld [vmem:[%s7 + $0x1c8] sm:$0xff]
    %v221 = vld [vmem:[%s7 + $0x1d0] sm:$0xff]
    %v222 = vld [vmem:[%s7 + $0x1d8] sm:$0xff]
    %v223 = vld [vmem:[%s7 + $0x1e0] sm:$0xff]
    %v224 = vld [vmem:[%s7 + $0x1e8] sm:$0xff]
    %v225 = vld [vmem:[%s7 + $0x1f0] sm:$0xff]
    %v226 = vld [vmem:[%s7 + $0x1f8] sm:$0xff]
    %v227 = vld [vmem:[%s7 + $0x200] sm:$0xff]
    %v228 = vld [vmem:[%s7 + $0x208] sm:$0xff]
    %v229 = vld [vmem:[%s7 + $0x210] sm:$0xff]
    %v230 = vld [vmem:[%s7 + $0x218] sm:$0xff]
    %v231 = vld [vmem:[%s7 + $0x220] sm:$0xff]
    %v232 = vld [vmem:[%s7 + $0x228] sm:$0xff]
    %v233 = vld [vmem:[%s7 + $0x230] sm:$0xff]
    %v234 = vld [vmem:[%s7 + $0x238] sm:$0xff]
    %v235 = vld [vmem:[%s7 + $0x240] sm:$0xff]
    %v236 = vld [vmem:[%s7 + $0x248] sm:$0xff]
    %v237 = vld [vmem:[%s7 + $0x250] sm:$0xff]
    %v238 = vld [vmem:[%s7 + $0x258] sm:$0xff]
    %v239 = vld [vmem:[%s7 + $0x260] sm:$0xff]
    %v240 = vld [vmem:[%s7 + $0x268] sm:$0xff]
    %v241 = vld [vmem:[%s7 + $0x270] sm:$0xff]
    %v242 = vld [vmem:[%s7 + $0x278] sm:$0xff]
    %v243 = vld [vmem:[%s7 + $0x280] sm:$0xff]
    %v244 = vld [vmem:[%s7 + $0x288] sm:$0xff]
    %v245 = vld [vmem:[%s7 + $0x290] sm:$0xff]
    %v246 = vld [vmem:[%s7 + $0x298] sm:$0xff]
    %v247 = vld [vmem:[%s7 + $0x2a0] sm:$0xff]
    %v248 = vld [vmem:[%s7 + $0x2a8] sm:$0xff]
    %v249 = vld [vmem:[%s7 + $0x2b0] sm:$0xff]
    %v250 = vld [vmem:[%s7 + $0x2b8] sm:$0xff]
    %v251 = vld [vmem:[%s7 + $0x2c0] sm:$0xff]
    %v252 = vld [vmem:[%s7 + $0x2c8] sm:$0xff]
    %v253 = vld [vmem:[%s7 + $0x2d0] sm:$0xff]
    %v254 = vld [vmem:[%s7 + $0x2d8] sm:$0xff]
    %v255 = vld [vmem:[%s7 + $0x2e0] sm:$0xff]
    %v256 = vld [vmem:[%s7 + $0x2e8] sm:$0xff]
    %v257 = vld [vmem:[%s7 + $0x2f0] sm:$0xff]
    %v258 = vld [vmem:[%s7 + $0x2f8] sm:$0xff]
    %v259 = vld [vmem:[%s7 + $0x300] sm:$0xff]
    %v260 = vld [vmem:[%s7 + $0x308] sm:$0xff]
    %v261 = vld [vmem:[%s7 + $0x310] sm:$0xff]
    %v262 = vld [vmem:[%s7 + $0x318] sm:$0xff]
    %v263 = vld [vmem:[%s7 + $0x320] sm:$0xff]
    %v264 = vld [vmem:[%s7 + $0x328] sm:$0xff]
    %v265 = vld [vmem:[%s7 + $0x330] sm:$0xff]
    %v266 = vld [vmem:[%s7 + $0x338] sm:$0xff]
    %v267 = vld [vmem:[%s7 + $0x340] sm:$0xff]
    %v268 = vld [vmem:[%s7 + $0x348] sm:$0xff]
    %v269 = vld [vmem:[%s7 + $0x350] sm:$0xff]
    %v270 = vld [vmem:[%s7 + $0x358] sm:$0xff]
    %v271 = vld [vmem:[%s7 + $0x360] sm:$0xff]
    %v272 = vld [vmem:[%s7 + $0x368] sm:$0xff]
    %v273 = vld [vmem:[%s7 + $0x370] sm:$0xff]
    %v274 = vld [vmem:[%s7 + $0x378] sm:$0xff]
    %v275 = vld [vmem:[%s8] sm:$0xff]
    %v277 = vperm.slane %v275, 0
    %v278 = vperm.slane %v275, 1
    %v279 = vperm.slane %v275, 2
    %v280 = vperm.slane %v275, 3
    %v281 = vperm.slane %v275, 4
    %v282 = vperm.slane %v275, 5
    %v283 = vperm.slane %v275, 6
    %291 = vmatpush.msra.mxu0 %v268
    %292 = vmatpush.msra.mxu0 %v261
    %293 = vmatpush.msra.mxu0 %v254
    %294 = vmatpush.msra.mxu0 %v247
    %295 = vmatpush.msra.mxu0 %v240
    %296 = vmatpush.msra.mxu0 %v233
    %297 = vmatpush.msra.mxu0 %v226
    %298 = vmatpush.msra.mxu0 %v219
    %299 = vmatpush.msra.mxu0 %v212
    %300 = vmatpush.msra.mxu0 %v205
    %301 = vmatpush.msra.mxu0 %v198
    %302 = vmatpush.msra.mxu0 %v191
    %303 = vmatpush.msra.mxu0 %v184
    %304 = vmatpush.msra.mxu0 %v177
    %305 = vmatpush.msra.mxu0 %v170
    %306 = vmatpush.msra.mxu0 %v163
    %307 = vmatmul.f32.gmra.mxu0 %v162
    %v308 = vpop.f32.mrf.mxu0
    %v309 = vadd.f32 %v277, %v308
    %310 = vdwg.mxu0
    %311 = vmatpush.msra.mxu0 %v269
    %312 = vmatpush.msra.mxu0 %v262
    %313 = vmatpush.msra.mxu0 %v255
    %314 = vmatpush.msra.mxu0 %v248
    %315 = vmatpush.msra.mxu0 %v241
    %316 = vmatpush.msra.mxu0 %v234
    %317 = vmatpush.msra.mxu0 %v227
    %318 = vmatpush.msra.mxu0 %v220
    %319 = vmatpush.msra.mxu0 %v213
    %320 = vmatpush.msra.mxu0 %v206
    %321 = vmatpush.msra.mxu0 %v199
    %322 = vmatpush.msra.mxu0 %v192
    %323 = vmatpush.msra.mxu0 %v185
    %324 = vmatpush.msra.mxu0 %v178
    %325 = vmatpush.msra.mxu0 %v171
    %326 = vmatpush.msra.mxu0 %v164
    %327 = vmatmul.f32.gmra.mxu0 %v162
    %v328 = vpop.f32.mrf.mxu0
    %v329 = vadd.f32 %v278, %v328
    %330 = vdwg.mxu0
    %331 = vmatpush.msra.mxu0 %v270
    %332 = vmatpush.msra.mxu0 %v263
    %333 = vmatpush.msra.mxu0 %v256
    %334 = vmatpush.msra.mxu0 %v249
    %335 = vmatpush.msra.mxu0 %v242
    %336 = vmatpush.msra.mxu0 %v235
    %337 = vmatpush.msra.mxu0 %v228
    %338 = vmatpush.msra.mxu0 %v221
    %339 = vmatpush.msra.mxu0 %v214
    %340 = vmatpush.msra.mxu0 %v207
    %341 = vmatpush.msra.mxu0 %v200
    %342 = vmatpush.msra.mxu0 %v193
    %343 = vmatpush.msra.mxu0 %v186
    %344 = vmatpush.msra.mxu0 %v179
    %345 = vmatpush.msra.mxu0 %v172
    %346 = vmatpush.msra.mxu0 %v165
    %347 = vmatmul.f32.gmra.mxu0 %v162
    %v348 = vpop.f32.mrf.mxu0
    %v349 = vadd.f32 %v279, %v348
    %350 = vdwg.mxu0
    %351 = vmatpush.msra.mxu0 %v271
    %352 = vmatpush.msra.mxu0 %v264
    %353 = vmatpush.msra.mxu0 %v257
    %354 = vmatpush.msra.mxu0 %v250
    %355 = vmatpush.msra.mxu0 %v243
    %356 = vmatpush.msra.mxu0 %v236
    %357 = vmatpush.msra.mxu0 %v229
    %358 = vmatpush.msra.mxu0 %v222
    %359 = vmatpush.msra.mxu0 %v215
    %360 = vmatpush.msra.mxu0 %v208
    %361 = vmatpush.msra.mxu0 %v201
    %362 = vmatpush.msra.mxu0 %v194
    %363 = vmatpush.msra.mxu0 %v187
    %364 = vmatpush.msra.mxu0 %v180
    %365 = vmatpush.msra.mxu0 %v173
    %366 = vmatpush.msra.mxu0 %v166
    %367 = vmatmul.f32.gmra.mxu0 %v162
    %v368 = vpop.f32.mrf.mxu0
    %v369 = vadd.f32 %v280, %v368
    %370 = vdwg.mxu0
    %371 = vmatpush.msra.mxu0 %v272
    %372 = vmatpush.msra.mxu0 %v265
    %373 = vmatpush.msra.mxu0 %v258
    %374 = vmatpush.msra.mxu0 %v251
    %375 = vmatpush.msra.mxu0 %v244
    %376 = vmatpush.msra.mxu0 %v237
    %377 = vmatpush.msra.mxu0 %v230
    %378 = vmatpush.msra.mxu0 %v223
    %379 = vmatpush.msra.mxu0 %v216
    %380 = vmatpush.msra.mxu0 %v209
    %381 = vmatpush.msra.mxu0 %v202
    %382 = vmatpush.msra.mxu0 %v195
    %383 = vmatpush.msra.mxu0 %v188
    %384 = vmatpush.msra.mxu0 %v181
    %385 = vmatpush.msra.mxu0 %v174
    %386 = vmatpush.msra.mxu0 %v167
    %387 = vmatmul.f32.gmra.mxu0 %v162
    %v388 = vpop.f32.mrf.mxu0
    %v389 = vadd.f32 %v281, %v388
    %390 = vdwg.mxu0
    %391 = vmatpush.msra.mxu0 %v273
    %392 = vmatpush.msra.mxu0 %v266
    %393 = vmatpush.msra.mxu0 %v259
    %394 = vmatpush.msra.mxu0 %v252
    %395 = vmatpush.msra.mxu0 %v245
    %396 = vmatpush.msra.mxu0 %v238
    %397 = vmatpush.msra.mxu0 %v231
    %398 = vmatpush.msra.mxu0 %v224
    %399 = vmatpush.msra.mxu0 %v217
    %400 = vmatpush.msra.mxu0 %v210
    %401 = vmatpush.msra.mxu0 %v203
    %402 = vmatpush.msra.mxu0 %v196
    %403 = vmatpush.msra.mxu0 %v189
    %404 = vmatpush.msra.mxu0 %v182
    %405 = vmatpush.msra.mxu0 %v175
    %406 = vmatpush.msra.mxu0 %v168
    %407 = vmatmul.f32.gmra.mxu0 %v162
    %v408 = vpop.f32.mrf.mxu0
    %v409 = vadd.f32 %v282, %v408
    %410 = vdwg.mxu0
    %411 = vmatpush.msra.mxu0 %v274
    %412 = vmatpush.msra.mxu0 %v267
    %413 = vmatpush.msra.mxu0 %v260
    %414 = vmatpush.msra.mxu0 %v253
    %415 = vmatpush.msra.mxu0 %v246
    %416 = vmatpush.msra.mxu0 %v239
    %417 = vmatpush.msra.mxu0 %v232
    %418 = vmatpush.msra.mxu0 %v225
    %419 = vmatpush.msra.mxu0 %v218
    %420 = vmatpush.msra.mxu0 %v211
    %421 = vmatpush.msra.mxu0 %v204
    %422 = vmatpush.msra.mxu0 %v197
    %423 = vmatpush.msra.mxu0 %v190
    %424 = vmatpush.msra.mxu0 %v183
    %425 = vmatpush.msra.mxu0 %v176
    %426 = vmatpush.msra.mxu0 %v169
    %427 = vmatmul.f32.gmra.mxu0 %v162
    %v428 = vpop.f32.mrf.mxu0
    %v429 = vadd.f32 %v283, %v428
    %430 = vdwg.mxu0
    %v431 = vtanh.pop %v309
    %v432 = vtanh.pop %v329
    %v433 = vtanh.pop %v349
    %v434 = vtanh.pop %v369
    %v435 = vtanh.pop %v389
    %v436 = vtanh.pop %v409
    %v437 = vtanh.pop %v429
    %438 = vst [vmem:[#allocation2] sm:$0xff] %v431
    %439 = vst [vmem:[#allocation2 + $0x8] sm:$0xff] %v432
    %440 = vst [vmem:[#allocation2 + $0x10] sm:$0xff] %v433
    %441 = vst [vmem:[#allocation2 + $0x18] sm:$0xff] %v434
    %442 = vst [vmem:[#allocation2 + $0x20] sm:$0xff] %v435
    %443 = vst [vmem:[#allocation2 + $0x28] sm:$0xff] %v436
    %444 = vst [vmem:[#allocation2 + $0x30] sm:$0xff] %v437
    // Predicated region
    $region38: #{mnist_generator_forward.1} parent=1 // pred_check
      _
    $region39: #{mnist_generator_forward.1} parent=1 // pred_check_branch
      %446 = sbr.rel (0) target = $region41
    $region40: #{mnist_generator_forward.1} parent=1 // pred_region
      %448 = vsyncadd [#allocation3], 0
      %s450 = sshll.u32 [#allocation2], 4
      %s451 = int_to_ptr.vmem [resolvable:$true] %s450
      %s452 = sshll.u32 %s9, 4
      %s453 = int_to_ptr.hbm [resolvable:$true] %s452
      %455 = dma.vmem_to_hbm [thread:$0]  %s451, 896, %s453, [#allocation3]
    $region41: #{mnist_generator_forward.1} parent=1 // pred_fallthru
      _
    // Predicated region
    $region42: #{mnist_generator_forward.1} parent=1 // pred_check
      _
    $region43: #{mnist_generator_forward.1} parent=1 // pred_check_branch
      %457 = sbr.rel (0) target = $region45
    $region44: #{mnist_generator_forward.1} parent=1 // pred_region
      %459 = dma.done [#allocation3], 896
    $region45: #{mnist_generator_forward.1} parent=1 // pred_fallthru
      _
    %460 = vsyncpa [#allocation3], 1

</llo_original>
